<compile_context>
chip_gen: v7x
topology: tpu7x:2x2x1
jax: 0.10.0
libtpu: 0.0.40
codegen_flags: <defaults>
</compile_context>

<pallas_src>
import functools

import jax
import jax.numpy as jnp
from jax.experimental import pallas as pl
from jax.experimental.pallas import tpu as pltpu


def _round_up(x, m):
    return ((x + m - 1) // m) * m


# ----------------------------------------------------------------------------
# Kernel
# ----------------------------------------------------------------------------
def _make_reduce_kernel(size, size_pad, tracked):
    """TreeLSTM REDUCE kernel.

    Refs (tracked case):
      l_ref  : (Bt, 2*size)          left child  [h | c]
      r_ref  : (Bt, 2*size)          right child [h | c]
      t_ref  : (Bt, 2*tracker)       tracker     [h | c]
      wl_ref : (size,    5*size_pad) pre-transposed, gate-padded left weights
      wr_ref : (size,    5*size_pad) right weights
      wt_ref : (tracker, 5*size_pad) tracker weights
      b_ref  : (1,       5*size_pad) bias (left Linear only), f32
      out_ref: (Bt, 2*size)          new node [h | c]
    """

    def kernel(*refs):
        if tracked:
            l_ref, r_ref, t_ref, wl_ref, wr_ref, wt_ref, b_ref, out_ref = refs
        else:
            l_ref, r_ref, wl_ref, wr_ref, b_ref, out_ref = refs
            t_ref = None
            wt_ref = None

        w_dtype = wl_ref.dtype
        # h / c halves sliced directly from the VMEM tiles (no HBM concat).
        hl = l_ref[:, :size].astype(w_dtype)
        hr = r_ref[:, :size].astype(w_dtype)
        cl = l_ref[:, size:].astype(jnp.float32)
        cr = r_ref[:, size:].astype(jnp.float32)

        # 2-3 accumulating MXU dots into one f32 accumulator; bias folded in.
        acc = b_ref[...] + jnp.dot(hl, wl_ref[...],
                                   preferred_element_type=jnp.float32)
        acc = acc + jnp.dot(hr, wr_ref[...],
                            preferred_element_type=jnp.float32)
        if tracked:
            t_size = t_ref.shape[-1] // 2
            ht = t_ref[:, :t_size].astype(w_dtype)
            acc = acc + jnp.dot(ht, wt_ref[...],
                                preferred_element_type=jnp.float32)

        # Each gate starts at a 128-lane-aligned column (size_pad % 128 == 0),
        # so extraction is a masked view, not a cross-lane shuffle.
        a = acc[:, 0 * size_pad:0 * size_pad + size]
        i = acc[:, 1 * size_pad:1 * size_pad + size]
        f1 = acc[:, 2 * size_pad:2 * size_pad + size]
        f2 = acc[:, 3 * size_pad:3 * size_pad + size]
        o = acc[:, 4 * size_pad:4 * size_pad + size]

        # sigmoid(x) = 0.5 * (tanh(0.5*x) + 1): single EUP op, no exp + divide.
        def sg(x):
            return 0.5 * (jnp.tanh(0.5 * x) + 1.0)

        c = jnp.tanh(a) * sg(i) + sg(f1) * cl + sg(f2) * cr
        h = sg(o) * jnp.tanh(c)

        # Two region stores of [h | c] (avoids a lane-axis concatenate).
        out_ref[:, :size] = h.astype(out_ref.dtype)
        out_ref[:, size:] = c.astype(out_ref.dtype)

    return kernel


# ----------------------------------------------------------------------------
# pallas_call plumbing
# ----------------------------------------------------------------------------
def _choose_block_b(batch):
    """Big batch tiles to amortize ~0.35us/step overhead; >=2 grid steps for
    very large batches so v7x's two TensorCores both engage."""
    if batch <= 256:
        return batch                       # one full-array tile (always legal)
    half = _round_up(pl.cdiv(batch, 2), 8)
    return min(512, half)


def _reduce_pallas(left, right, tracking, wl, wr, wt, b, size, size_pad):
    batch = left.shape[0]
    tracked = tracking is not None
    block_b = _choose_block_b(batch)
    grid = (pl.cdiv(batch, block_b),)

    def act_spec(arr):
        feat = arr.shape[1]
        return pl.BlockSpec((block_b, feat), lambda i: (i, 0))

    def const_spec(arr):
        # Constant index_map -> weights / bias stay VMEM-resident across grid.
        return pl.BlockSpec(arr.shape, lambda i: (0, 0))

    inputs = [left, right]
    in_specs = [act_spec(left), act_spec(right)]
    if tracked:
        inputs.append(tracking)
        in_specs.append(act_spec(tracking))
    inputs += [wl, wr]
    in_specs += [const_spec(wl), const_spec(wr)]
    if tracked:
        inputs.append(wt)
        in_specs.append(const_spec(wt))
    inputs.append(b)
    in_specs.append(const_spec(b))

    # Rough resident-VMEM estimate: double-buffered activation tiles + pinned
    # weights + accumulator.  Only raise the scoped limit when the defaults
    # (16 MiB v5e / 32 MiB v6e, v7x) would be tight; cap at 64 MiB (v7x phys).
    act_feat = sum(a.shape[1]
                   for a in (left, right) + ((tracking,) if tracked else ()))
    est = 2 * block_b * (act_feat * left.dtype.itemsize + 2 * size * 4)
    est += 2 * (wl.size + wr.size + (wt.size if tracked else 0)) * wl.dtype.itemsize
    est += block_b * 5 * size_pad * 4 + b.size * 4
    params = dict(dimension_semantics=("parallel",))
    if est > 12 * 1024 * 1024:
        params["vmem_limit_bytes"] = int(min(max(2 * est, 32 * 1024 * 1024),
                                             64 * 1024 * 1024))
    # TODO(synk): for size >~ 512 on v5e, also store the pinned weights bf16
    # and single-buffer the constant BlockSpecs to fit the 16 MiB default.

    return pl.pallas_call(
        _make_reduce_kernel(size, size_pad, tracked),
        out_shape=jax.ShapeDtypeStruct((batch, 2 * size), jnp.float32),
        grid_spec=pltpu.PrefetchScalarGridSpec(
            num_scalar_prefetch=0,
            grid=grid,
            in_specs=in_specs,
            out_specs=pl.BlockSpec((block_b, 2 * size), lambda i: (i, 0)),
        ),
        compiler_params=pltpu.CompilerParams(**params),
    )(*inputs)


@jax.jit
def _forward_tracked(left, right, tracking, wl, wr, wt, b):
    size = left.shape[1] // 2
    size_pad = wl.shape[1] // 5
    return _reduce_pallas(left, right, tracking, wl, wr, wt, b, size, size_pad)


@jax.jit
def _forward_untracked(left, right, wl, wr, b):
    size = left.shape[1] // 2
    size_pad = wl.shape[1] // 5
    return _reduce_pallas(left, right, None, wl, wr, None, b, size, size_pad)


# ----------------------------------------------------------------------------
# Module wrapper
# ----------------------------------------------------------------------------
class Reduce:
    """JAX/Pallas port of spinn.spinn.Reduce (TreeLSTM composition)."""

    def __init__(self, size, tracker_size=None, key=None, use_bf16_matmul=False):
        self.size = size
        self.tracker_size = tracker_size
        self.size_pad = _round_up(size, 128)
        if key is None:
            key = jax.random.PRNGKey(0)
        k_wl, k_bl, k_wr, k_wt = jax.random.split(key, 4)
        s = 1.0 / float(size) ** 0.5
        # nn.Linear(size, 5*size) params, stored pre-transposed: (in, 5*size).
        self.w_left_t = jax.random.uniform(k_wl, (size, 5 * size),
                                           jnp.float32, -s, s)
        self.b_left = jax.random.uniform(k_bl, (1, 5 * size),
                                         jnp.float32, -s, s)
        self.w_right_t = jax.random.uniform(k_wr, (size, 5 * size),
                                            jnp.float32, -s, s)
        if tracker_size is not None:
            st = 1.0 / float(tracker_size) ** 0.5
            self.w_track_t = jax.random.uniform(k_wt, (tracker_size, 5 * size),
                                                jnp.float32, -st, st)
        w_dtype = jnp.bfloat16 if use_bf16_matmul else jnp.float32
        # Gate-padded (lane-aligned) kernel-side parameters.
        self.wl_pad = self._pad_gates(self.w_left_t).astype(w_dtype)
        self.wr_pad = self._pad_gates(self.w_right_t).astype(w_dtype)
        self.wt_pad = (self._pad_gates(self.w_track_t).astype(w_dtype)
                       if tracker_size is not None else None)
        self.b_pad = self._pad_gates(self.b_left)          # bias stays f32

    def _pad_gates(self, w):
        # (in, 5*size) -> (in, 5, size) -> pad gate cols to size_pad -> flatten.
        rows = w.shape[0]
        w3 = w.reshape(rows, 5, self.size)
        w3 = jnp.pad(w3, ((0, 0), (0, 0), (0, self.size_pad - self.size)))
        return w3.reshape(rows, 5 * self.size_pad)

    # -- preferred, fully batched interface ---------------------------------
    def forward_batched(self, left, right, tracking=None):
        """left/right: (B, 2*size) = [h|c]; tracking: (B, 2*tracker) or None.
        Inputs may be f32 or bf16 (bf16 halves the activation DMA stream on
        v6e/v7x); gate math and the output are f32.  Returns (B, 2*size)."""
        if self.tracker_size is not None:
            assert tracking is not None
            return _forward_tracked(left, right, tracking,
                                    self.wl_pad, self.wr_pad, self.wt_pad,
                                    self.b_pad)
        return _forward_untracked(left, right,
                                  self.wl_pad, self.wr_pad, self.b_pad)

    # -- compatibility with the original iterable-of-nodes interface --------
    @staticmethod
    def _bundle(states):
        if states is None:
            return None
        states = tuple(states)
        if states[0] is None:
            return None
        return jnp.concatenate(states, axis=0)

    def __call__(self, left_in, right_in, tracking=None):
        # NOTE: prefer forward_batched() with whole device arrays — the per
        # node concat / split here is pure host-dispatch overhead.
        left = self._bundle(left_in)
        right = self._bundle(right_in)
        track = self._bundle(tracking) if self.tracker_size is not None else None
        hc = self.forward_batched(left, right, track)
        return [hc[i:i + 1, :] for i in range(hc.shape[0])]


# TODO(synk): SPINN's full shift-reduce loop (and the Tracker LSTMCell driver)
# is data-dependent host-side stack manipulation; fusing the transition
# schedule into one gridded pallas_call via PrefetchScalarGridSpec is not
# implemented here — only the Reduce composition is kernelized.


# ----------------------------------------------------------------------------
# Pure-JAX reference (for correctness check)
# ----------------------------------------------------------------------------
def reference(mod, left, right, tracking=None, matmul_dtype=jnp.float32):
    size = mod.size
    f32 = jnp.float32
    hl = left[:, :size].astype(matmul_dtype)
    cl = left[:, size:].astype(f32)
    hr = right[:, :size].astype(matmul_dtype)
    cr = right[:, size:].astype(f32)
    lstm_in = mod.b_left + jnp.dot(hl, mod.w_left_t.astype(matmul_dtype),
                                   preferred_element_type=f32)
    lstm_in = lstm_in + jnp.dot(hr, mod.w_right_t.astype(matmul_dtype),
                                preferred_element_type=f32)
    if tracking is not None and mod.tracker_size is not None:
        ht = tracking[:, :mod.tracker_size].astype(matmul_dtype)
        lstm_in = lstm_in + jnp.dot(ht, mod.w_track_t.astype(matmul_dtype),
                                    preferred_element_type=f32)
    a, i, f1, f2, o = [lstm_in[:, k * size:(k + 1) * size] for k in range(5)]
    c = (jnp.tanh(a) * jax.nn.sigmoid(i)
         + jax.nn.sigmoid(f1) * cl + jax.nn.sigmoid(f2) * cr)
    h = jax.nn.sigmoid(o) * jnp.tanh(c)
    return jnp.concatenate([h, c], axis=1)


if __name__ == "__main__":
    B = 8            # batch of nodes being REDUCEd
    SIZE = 32        # model state size
    TRACKER = 16     # tracker LSTM hidden size

    key = jax.random.PRNGKey(0)
    k_mod, k_l, k_r, k_t = jax.random.split(key, 4)

    mod = Reduce(SIZE, tracker_size=TRACKER, key=k_mod)

    left = jax.random.normal(k_l, (B, 2 * SIZE), jnp.float32)
    right = jax.random.normal(k_r, (B, 2 * SIZE), jnp.float32)
    track = jax.random.normal(k_t, (B, 2 * TRACKER), jnp.float32)

    # Batched path (preferred)
    out = jax.block_until_ready(mod.forward_batched(left, right, track))
    ref = reference(mod, left, right, track)
    assert out.shape == (B, 2 * SIZE)
    assert jnp.allclose(out, ref, atol=1e-5, rtol=1e-5), "tracked batched mismatch"

    # Original iterable-of-nodes interface (same semantics as the nn.Module)
    left_list = [left[i:i + 1] for i in range(B)]
    right_list = [right[i:i + 1] for i in range(B)]
    track_list = [track[i:i + 1] for i in range(B)]
    out_list = mod(left_list, right_list, track_list)
    got = jnp.concatenate([jax.block_until_ready(o) for o in out_list], axis=0)
    assert jnp.allclose(got, ref, atol=1e-5, rtol=1e-5), "list-interface mismatch"

    # No-tracker path
    mod_nt = Reduce(SIZE, tracker_size=None, key=k_mod)
    out_nt = jax.block_until_ready(mod_nt.forward_batched(left, right))
    ref_nt = reference(mod_nt, left, right, None)
    assert jnp.allclose(out_nt, ref_nt, atol=1e-5, rtol=1e-5), "untracked mismatch"

    # bf16 matmul-operand path: bf16 weights AND bf16 activations in HBM
    # (halves the dominant activation DMA stream on v6e/v7x); gate math f32.
    # Validated against a bf16-matmul reference, plus a loose f32 sanity check.
    mod_bf16 = Reduce(SIZE, tracker_size=TRACKER, key=k_mod, use_bf16_matmul=True)
    left_b = left.astype(jnp.bfloat16)
    right_b = right.astype(jnp.bfloat16)
    track_b = track.astype(jnp.bfloat16)
    out_bf16 = jax.block_until_ready(
        mod_bf16.forward_batched(left_b, right_b, track_b))
    ref_bf16 = reference(mod_bf16, left_b, right_b, track_b,
                         matmul_dtype=jnp.bfloat16)
    assert jnp.allclose(out_bf16, ref_bf16, atol=1e-3, rtol=1e-3), \
        "bf16 path vs bf16 reference mismatch"
    assert jnp.allclose(out_bf16, ref, atol=5e-2, rtol=5e-2), "bf16 path far off"

    print("KERNEL_OK")
</pallas_src>

<mosaic_0001>
module attributes {stable_mosaic.version = 11 : i64} {
  func.func @kernel(%arg0: i32, %arg1: memref<8x64xf32, #tpu.memory_space<vmem>>, %arg2: memref<8x64xf32, #tpu.memory_space<vmem>>, %arg3: memref<8x32xf32, #tpu.memory_space<vmem>>, %arg4: memref<32x640xf32, #tpu.memory_space<vmem>>, %arg5: memref<32x640xf32, #tpu.memory_space<vmem>>, %arg6: memref<16x640xf32, #tpu.memory_space<vmem>>, %arg7: memref<1x640xf32, #tpu.memory_space<vmem>>, %arg8: memref<8x64xf32, #tpu.memory_space<vmem>>) attributes {dimension_semantics = [#tpu.dimension_semantics<parallel>], iteration_bounds = array<i64: 1>, scalar_prefetch = 0 : i64, scratch_operands = 0 : i64, tpu.core_type = #tpu.core_type<tc>, window_params = [{transform_indices = @transform_0, window_bounds = array<i64: 8, 64>}, {transform_indices = @transform_1, window_bounds = array<i64: 8, 64>}, {transform_indices = @transform_2, window_bounds = array<i64: 8, 32>}, {pipeline_mode = #tpu.pipeline_mode<synchronous>, transform_indices = @transform_3, window_bounds = array<i64: 32, 640>}, {pipeline_mode = #tpu.pipeline_mode<synchronous>, transform_indices = @transform_4, window_bounds = array<i64: 32, 640>}, {pipeline_mode = #tpu.pipeline_mode<synchronous>, transform_indices = @transform_5, window_bounds = array<i64: 16, 640>}, {pipeline_mode = #tpu.pipeline_mode<synchronous>, transform_indices = @transform_6, window_bounds = array<i64: 1, 640>}, {transform_indices = @transform_7, window_bounds = array<i64: 8, 64>}]} {
    %c0 = arith.constant 0 : index
    %c0_0 = arith.constant 0 : index
    %0 = vector.load %arg1[%c0, %c0_0] : memref<8x64xf32, #tpu.memory_space<vmem>>, vector<8x32xf32>
    %c0_1 = arith.constant 0 : index
    %c0_2 = arith.constant 0 : index
    %1 = vector.load %arg2[%c0_1, %c0_2] : memref<8x64xf32, #tpu.memory_space<vmem>>, vector<8x32xf32>
    %c0_3 = arith.constant 0 : index
    %c32 = arith.constant 32 : index
    %2 = vector.load %arg1[%c0_3, %c32] : memref<8x64xf32, #tpu.memory_space<vmem>>, vector<8x32xf32>
    %c0_4 = arith.constant 0 : index
    %c32_5 = arith.constant 32 : index
    %3 = vector.load %arg2[%c0_4, %c32_5] : memref<8x64xf32, #tpu.memory_space<vmem>>, vector<8x32xf32>
    %c0_6 = arith.constant 0 : index
    %c0_7 = arith.constant 0 : index
    %4 = vector.load %arg7[%c0_6, %c0_7] : memref<1x640xf32, #tpu.memory_space<vmem>>, vector<1x640xf32>
    %c0_8 = arith.constant 0 : index
    %c0_9 = arith.constant 0 : index
    %5 = vector.load %arg4[%c0_8, %c0_9] : memref<32x640xf32, #tpu.memory_space<vmem>>, vector<32x640xf32>
    %cst = arith.constant dense<0.000000e+00> : vector<8x640xf32>
    %6 = tpu.matmul %0, %5, %cst {dimension_numbers = #tpu.dot_dimension_numbers<[1], [0], [0], [1], [0, 0, 1, 1], [], []>} : vector<8x32xf32>, vector<32x640xf32>, vector<8x640xf32> -> vector<8x640xf32>
    %7 = vector.broadcast %4 : vector<1x640xf32> to vector<8x640xf32>
    %8 = arith.addf %7, %6 : vector<8x640xf32>
    %c0_10 = arith.constant 0 : index
    %c0_11 = arith.constant 0 : index
    %9 = vector.load %arg5[%c0_10, %c0_11] : memref<32x640xf32, #tpu.memory_space<vmem>>, vector<32x640xf32>
    %cst_12 = arith.constant dense<0.000000e+00> : vector<8x640xf32>
    %10 = tpu.matmul %1, %9, %cst_12 {dimension_numbers = #tpu.dot_dimension_numbers<[1], [0], [0], [1], [0, 0, 1, 1], [], []>} : vector<8x32xf32>, vector<32x640xf32>, vector<8x640xf32> -> vector<8x640xf32>
    %11 = arith.addf %8, %10 : vector<8x640xf32>
    %c0_13 = arith.constant 0 : index
    %c0_14 = arith.constant 0 : index
    %12 = vector.load %arg3[%c0_13, %c0_14] : memref<8x32xf32, #tpu.memory_space<vmem>>, vector<8x16xf32>
    %c0_15 = arith.constant 0 : index
    %c0_16 = arith.constant 0 : index
    %13 = vector.load %arg6[%c0_15, %c0_16] : memref<16x640xf32, #tpu.memory_space<vmem>>, vector<16x640xf32>
    %cst_17 = arith.constant dense<0.000000e+00> : vector<8x640xf32>
    %14 = tpu.matmul %12, %13, %cst_17 {dimension_numbers = #tpu.dot_dimension_numbers<[1], [0], [0], [1], [0, 0, 1, 1], [], []>} : vector<8x16xf32>, vector<16x640xf32>, vector<8x640xf32> -> vector<8x640xf32>
    %15 = arith.addf %11, %14 : vector<8x640xf32>
    %16 = vector.extract_strided_slice %15 {offsets = [0, 0], sizes = [8, 32], strides = [1, 1]} : vector<8x640xf32> to vector<8x32xf32>
    %17 = vector.extract_strided_slice %15 {offsets = [0, 128], sizes = [8, 32], strides = [1, 1]} : vector<8x640xf32> to vector<8x32xf32>
    %18 = vector.extract_strided_slice %15 {offsets = [0, 256], sizes = [8, 32], strides = [1, 1]} : vector<8x640xf32> to vector<8x32xf32>
    %19 = vector.extract_strided_slice %15 {offsets = [0, 384], sizes = [8, 32], strides = [1, 1]} : vector<8x640xf32> to vector<8x32xf32>
    %20 = vector.extract_strided_slice %15 {offsets = [0, 512], sizes = [8, 32], strides = [1, 1]} : vector<8x640xf32> to vector<8x32xf32>
    %21 = math.tanh %16 : vector<8x32xf32>
    %cst_18 = arith.constant 5.000000e-01 : f32
    %22 = vector.broadcast %cst_18 : f32 to vector<8x32xf32>
    %23 = arith.mulf %22, %17 : vector<8x32xf32>
    %24 = math.tanh %23 : vector<8x32xf32>
    %cst_19 = arith.constant 1.000000e+00 : f32
    %25 = vector.broadcast %cst_19 : f32 to vector<8x32xf32>
    %26 = arith.addf %24, %25 : vector<8x32xf32>
    %cst_20 = arith.constant 5.000000e-01 : f32
    %27 = vector.broadcast %cst_20 : f32 to vector<8x32xf32>
    %28 = arith.mulf %27, %26 : vector<8x32xf32>
    %29 = arith.mulf %21, %28 : vector<8x32xf32>
    %cst_21 = arith.constant 5.000000e-01 : f32
    %30 = vector.broadcast %cst_21 : f32 to vector<8x32xf32>
    %31 = arith.mulf %30, %18 : vector<8x32xf32>
    %32 = math.tanh %31 : vector<8x32xf32>
    %cst_22 = arith.constant 1.000000e+00 : f32
    %33 = vector.broadcast %cst_22 : f32 to vector<8x32xf32>
    %34 = arith.addf %32, %33 : vector<8x32xf32>
    %cst_23 = arith.constant 5.000000e-01 : f32
    %35 = vector.broadcast %cst_23 : f32 to vector<8x32xf32>
    %36 = arith.mulf %35, %34 : vector<8x32xf32>
    %37 = arith.mulf %36, %2 : vector<8x32xf32>
    %38 = arith.addf %29, %37 : vector<8x32xf32>
    %cst_24 = arith.constant 5.000000e-01 : f32
    %39 = vector.broadcast %cst_24 : f32 to vector<8x32xf32>
    %40 = arith.mulf %39, %19 : vector<8x32xf32>
    %41 = math.tanh %40 : vector<8x32xf32>
    %cst_25 = arith.constant 1.000000e+00 : f32
    %42 = vector.broadcast %cst_25 : f32 to vector<8x32xf32>
    %43 = arith.addf %41, %42 : vector<8x32xf32>
    %cst_26 = arith.constant 5.000000e-01 : f32
    %44 = vector.broadcast %cst_26 : f32 to vector<8x32xf32>
    %45 = arith.mulf %44, %43 : vector<8x32xf32>
    %46 = arith.mulf %45, %3 : vector<8x32xf32>
    %47 = arith.addf %38, %46 : vector<8x32xf32>
    %cst_27 = arith.constant 5.000000e-01 : f32
    %48 = vector.broadcast %cst_27 : f32 to vector<8x32xf32>
    %49 = arith.mulf %48, %20 : vector<8x32xf32>
    %50 = math.tanh %49 : vector<8x32xf32>
    %cst_28 = arith.constant 1.000000e+00 : f32
    %51 = vector.broadcast %cst_28 : f32 to vector<8x32xf32>
    %52 = arith.addf %50, %51 : vector<8x32xf32>
    %cst_29 = arith.constant 5.000000e-01 : f32
    %53 = vector.broadcast %cst_29 : f32 to vector<8x32xf32>
    %54 = arith.mulf %53, %52 : vector<8x32xf32>
    %55 = math.tanh %47 : vector<8x32xf32>
    %56 = arith.mulf %54, %55 : vector<8x32xf32>
    %c0_30 = arith.constant 0 : index
    %c0_31 = arith.constant 0 : index
    %57 = vector.load %arg8[%c0_30, %c0_31] : memref<8x64xf32, #tpu.memory_space<vmem>>, vector<8x32xf32>
    tpu.vector_store %arg8[%c0_30, %c0_31], %56 {strides = array<i32>} : memref<8x64xf32, #tpu.memory_space<vmem>>, vector<8x32xf32>,
    %c0_32 = arith.constant 0 : index
    %c32_33 = arith.constant 32 : index
    %58 = vector.load %arg8[%c0_32, %c32_33] : memref<8x64xf32, #tpu.memory_space<vmem>>, vector<8x32xf32>
    tpu.vector_store %arg8[%c0_32, %c32_33], %47 {strides = array<i32>} : memref<8x64xf32, #tpu.memory_space<vmem>>, vector<8x32xf32>,
    return
  }
  func.func @transform_0(%arg0: i32) -> (i32, i32) {
    %c0_i32 = arith.constant 0 : i32
    %c0_i32_0 = arith.constant 0 : i32
    return %arg0, %c0_i32 : i32, i32
  }
  func.func @transform_1(%arg0: i32) -> (i32, i32) {
    %c0_i32 = arith.constant 0 : i32
    %c0_i32_0 = arith.constant 0 : i32
    return %arg0, %c0_i32 : i32, i32
  }
  func.func @transform_2(%arg0: i32) -> (i32, i32) {
    %c0_i32 = arith.constant 0 : i32
    %c0_i32_0 = arith.constant 0 : i32
    return %arg0, %c0_i32 : i32, i32
  }
  func.func @transform_3(%arg0: i32) -> (i32, i32) {
    %c0_i32 = arith.constant 0 : i32
    %c0_i32_0 = arith.constant 0 : i32
    %c0_i32_1 = arith.constant 0 : i32
    return %c0_i32, %c0_i32_0 : i32, i32
  }
  func.func @transform_4(%arg0: i32) -> (i32, i32) {
    %c0_i32 = arith.constant 0 : i32
    %c0_i32_0 = arith.constant 0 : i32
    %c0_i32_1 = arith.constant 0 : i32
    return %c0_i32, %c0_i32_0 : i32, i32
  }
  func.func @transform_5(%arg0: i32) -> (i32, i32) {
    %c0_i32 = arith.constant 0 : i32
    %c0_i32_0 = arith.constant 0 : i32
    %c0_i32_1 = arith.constant 0 : i32
    return %c0_i32, %c0_i32_0 : i32, i32
  }
  func.func @transform_6(%arg0: i32) -> (i32, i32) {
    %c0_i32 = arith.constant 0 : i32
    %c0_i32_0 = arith.constant 0 : i32
    %c0_i32_1 = arith.constant 0 : i32
    return %c0_i32, %c0_i32_0 : i32, i32
  }
  func.func @transform_7(%arg0: i32) -> (i32, i32) {
    %c0_i32 = arith.constant 0 : i32
    %c0_i32_0 = arith.constant 0 : i32
    return %arg0, %c0_i32 : i32, i32
  }
}

</mosaic_0001>

<llo_original>
// kernel: _forward_tracked.1
$region0: #{_forward_tracked.1}
  #allocation0 [shape = 'u32[]', space=smem, size = 0x4, offset = 0x4, fixed_abs, tag = 'smem constant byte address 0x4 - core index']
  #allocation1 [shape = 'u32[144,128]{1,0:T(1,128)}', space=vmem, size = 0x12000, scoped, tag = 'internal scratch']
  %s0 = inlined_call_operand.hbm [shape: f32[8,64], index: 0, kind: input, shape index: {}]
  %s1 = inlined_call_operand.hbm [shape: f32[8,64], index: 1, kind: input, shape index: {}]
  %s2 = inlined_call_operand.hbm [shape: f32[8,32], index: 2, kind: input, shape index: {}]
  %s3 = inlined_call_operand.hbm [shape: f32[32,640], index: 3, kind: input, shape index: {}]
  %s4 = inlined_call_operand.hbm [shape: f32[32,640], index: 4, kind: input, shape index: {}]
  %s5 = inlined_call_operand.hbm [shape: f32[16,640], index: 5, kind: input, shape index: {}]
  %s6 = inlined_call_operand.vmem [shape: f32[1,640], index: 6, kind: input, shape index: {}]
  %s7 = inlined_call_operand.hbm [shape: f32[8,64], index: 7, kind: output, shape index: {}]
  %s8 = sld [smem:[#allocation0]]
  $region62: #{_forward_tracked.1} parent=0
    _
  %s10 = ssub.s32 1, %s8
  %s11 = scalar_select 0, %s10, %s8
  $region1: #{_forward_tracked.1} parent=0
    #allocation2 [shape = 'u8[4096]{0}', space=vmem, size = 0x1000, scoped, tag = 'input window, operand 0, single buffered']
    #allocation3 [shape = 's32[1]{0}', space=sflag, size = 0x4, scoped, tag = 'scoped memory for _forward_tracked.1']
    #allocation4 [shape = 's32[1]{0}', space=sflag, size = 0x4, scoped, tag = 'scoped memory for _forward_tracked.1']
    #allocation5 [shape = 'u8[4096]{0}', space=vmem, size = 0x1000, scoped, tag = 'input window, operand 1, single buffered']
    #allocation6 [shape = 's32[1]{0}', space=sflag, size = 0x4, scoped, tag = 'scoped memory for _forward_tracked.1']
    #allocation7 [shape = 'u8[4096]{0}', space=vmem, size = 0x1000, scoped, tag = 'input window, operand 2, single buffered']
    #allocation8 [shape = 'u8[81920]{0}', space=vmem, size = 0x14000, scoped, tag = 'input window, operand 3, single buffered']
    #allocation9 [shape = 's32[1]{0}', space=sflag, size = 0x4, scoped, tag = 'scoped memory for _forward_tracked.1']
    #allocation10 [shape = 'u8[81920]{0}', space=vmem, size = 0x14000, scoped, tag = 'input window, operand 4, single buffered']
    #allocation11 [shape = 'u8[40960]{0}', space=vmem, size = 0xa000, scoped, tag = 'input window, operand 5, single buffered']
    #allocation12 [shape = 's32[1]{0}', space=sflag, size = 0x4, scoped, tag = 'scoped memory for _forward_tracked.1']
    #allocation13 [shape = 'u8[4096]{0}', space=vmem, size = 0x1000, scoped, tag = 'output window, operand 0, single buffered']
    %12 = vsyncpa [#allocation3], 0
    %13 = vsyncpa [#allocation6], 0
    %14 = vsyncpa [#allocation9], 0
    %15 = vsyncpa [#allocation12], 0
    %16 = vsyncpa [#allocation4], 0
    // Predicated region
    $region2: #{_forward_tracked.1} parent=1 // pred_check
      _
    $region3: #{_forward_tracked.1} parent=1 // pred_check_branch
      %18 = sbr.rel (0) target = $region5
    $region4: #{_forward_tracked.1} parent=1 // pred_region
      %s20 = ssub.s32 128, 128
      %21 = vsyncadd [#allocation3], %s20
      %s23 = sshll.u32 [#allocation2], 4
      %s24 = int_to_ptr.vmem [resolvable:$true] %s23
      %26 = dma.hbm_to_vmem [thread:$0]  %s0, 128, %s24, [#allocation3]
    $region5: #{_forward_tracked.1} parent=1 // pred_fallthru
      _
    // Predicated region
    $region6: #{_forward_tracked.1} parent=1 // pred_check
      _
    $region7: #{_forward_tracked.1} parent=1 // pred_check_branch
      %28 = sbr.rel (0) target = $region9
    $region8: #{_forward_tracked.1} parent=1 // pred_region
      %s30 = ssub.s32 128, 128
      %31 = vsyncadd [#allocation6], %s30
      %s33 = sshll.u32 [#allocation5], 4
      %s34 = int_to_ptr.vmem [resolvable:$true] %s33
      %36 = dma.hbm_to_vmem [thread:$0]  %s1, 128, %s34, [#allocation6]
    $region9: #{_forward_tracked.1} parent=1 // pred_fallthru
      _
    // Predicated region
    $region10: #{_forward_tracked.1} parent=1 // pred_check
      _
    $region11: #{_forward_tracked.1} parent=1 // pred_check_branch
      %38 = sbr.rel (0) target = $region13
    $region12: #{_forward_tracked.1} parent=1 // pred_region
      %s40 = ssub.s32 128, 128
      %41 = vsyncadd [#allocation6], %s40
      %s43 = sshll.u32 [#allocation7], 4
      %s44 = int_to_ptr.vmem [resolvable:$true] %s43
      %46 = dma.hbm_to_vmem [thread:$0]  %s2, 128, %s44, [#allocation6]
    $region13: #{_forward_tracked.1} parent=1 // pred_fallthru
      _
    // Predicated region
    $region14: #{_forward_tracked.1} parent=1 // pred_check
      _
    $region15: #{_forward_tracked.1} parent=1 // pred_check_branch
      %48 = sbr.rel (0) target = $region17
    $region16: #{_forward_tracked.1} parent=1 // pred_region
      %s50 = ssub.s32 2560, 2560
      %51 = vsyncadd [#allocation9], %s50
      %s52 = sshll.u32 [#allocation8], 4
      %s53 = int_to_ptr.vmem [resolvable:$true] %s52
      %58 = dma.hbm_to_vmem [thread:$0]  %s3, 2560, %s53, [#allocation9], 640, 640, 40
    $region17: #{_forward_tracked.1} parent=1 // pred_fallthru
      _
    // Predicated region
    $region18: #{_forward_tracked.1} parent=1 // pred_check
      _
    $region19: #{_forward_tracked.1} parent=1 // pred_check_branch
      %60 = sbr.rel (0) target = $region21
    $region20: #{_forward_tracked.1} parent=1 // pred_region
      %s62 = ssub.s32 2560, 2560
      %63 = vsyncadd [#allocation9], %s62
      %s64 = sshll.u32 [#allocation10], 4
      %s65 = int_to_ptr.vmem [resolvable:$true] %s64
      %70 = dma.hbm_to_vmem [thread:$0]  %s4, 2560, %s65, [#allocation9], 640, 640, 40
    $region21: #{_forward_tracked.1} parent=1 // pred_fallthru
      _
    // Predicated region
    $region22: #{_forward_tracked.1} parent=1 // pred_check
      _
    $region23: #{_forward_tracked.1} parent=1 // pred_check_branch
      %72 = sbr.rel (0) target = $region25
    $region24: #{_forward_tracked.1} parent=1 // pred_region
      %s74 = ssub.s32 1280, 1280
      %75 = vsyncadd [#allocation12], %s74
      %s76 = sshll.u32 [#allocation11], 4
      %s77 = int_to_ptr.vmem [resolvable:$true] %s76
      %82 = dma.hbm_to_vmem [thread:$0]  %s5, 1280, %s77, [#allocation12], 640, 640, 40
    $region25: #{_forward_tracked.1} parent=1 // pred_fallthru
      _
    // Predicated region
    $region26: #{_forward_tracked.1} parent=1 // pred_check
      _
    $region27: #{_forward_tracked.1} parent=1 // pred_check_branch
      %84 = sbr.rel (0) target = $region29
    $region28: #{_forward_tracked.1} parent=1 // pred_region
      _
    $region29: #{_forward_tracked.1} parent=1 // pred_fallthru
      _
    // Predicated region
    $region30: #{_forward_tracked.1} parent=1 // pred_check
      _
    $region31: #{_forward_tracked.1} parent=1 // pred_check_branch
      %86 = sbr.rel (0) target = $region33
    $region32: #{_forward_tracked.1} parent=1 // pred_region
      %87 = dma.done [#allocation3], 128
    $region33: #{_forward_tracked.1} parent=1 // pred_fallthru
      _
    // Predicated region
    $region34: #{_forward_tracked.1} parent=1 // pred_check
      _
    $region35: #{_forward_tracked.1} parent=1 // pred_check_branch
      %89 = sbr.rel (0) target = $region37
    $region36: #{_forward_tracked.1} parent=1 // pred_region
      %90 = dma.done [#allocation6], 128
    $region37: #{_forward_tracked.1} parent=1 // pred_fallthru
      _
    // Predicated region
    $region38: #{_forward_tracked.1} parent=1 // pred_check
      _
    $region39: #{_forward_tracked.1} parent=1 // pred_check_branch
      %92 = sbr.rel (0) target = $region41
    $region40: #{_forward_tracked.1} parent=1 // pred_region
      %93 = dma.done [#allocation6], 128
    $region41: #{_forward_tracked.1} parent=1 // pred_fallthru
      _
    // Predicated region
    $region42: #{_forward_tracked.1} parent=1 // pred_check
      _
    $region43: #{_forward_tracked.1} parent=1 // pred_check_branch
      %95 = sbr.rel (0) target = $region45
    $region44: #{_forward_tracked.1} parent=1 // pred_region
      %96 = dma.done [#allocation9], 2560
    $region45: #{_forward_tracked.1} parent=1 // pred_fallthru
      _
    // Predicated region
    $region46: #{_forward_tracked.1} parent=1 // pred_check
      _
    $region47: #{_forward_tracked.1} parent=1 // pred_check_branch
      %98 = sbr.rel (0) target = $region49
    $region48: #{_forward_tracked.1} parent=1 // pred_region
      %99 = dma.done [#allocation9], 2560
    $region49: #{_forward_tracked.1} parent=1 // pred_fallthru
      _
    // Predicated region
    $region50: #{_forward_tracked.1} parent=1 // pred_check
      _
    $region51: #{_forward_tracked.1} parent=1 // pred_check_branch
      %101 = sbr.rel (0) target = $region53
    $region52: #{_forward_tracked.1} parent=1 // pred_region
      %102 = dma.done [#allocation12], 1280
    $region53: #{_forward_tracked.1} parent=1 // pred_fallthru
      _
    %v103 = vld [vmem:[#allocation2] sm:$0xff]
    %v104 = vld [vmem:[#allocation5] sm:$0xff]
    %v105 = vld [vmem:[%s6] sm:$0x1f]
    %v106 = vld [vmem:[#allocation8] sm:$0xff]
    %v107 = vld [vmem:[#allocation8 + $0x8] sm:$0xff]
    %v108 = vld [vmem:[#allocation8 + $0x10] sm:$0xff]
    %v109 = vld [vmem:[#allocation8 + $0x18] sm:$0xff]
    %v110 = vld [vmem:[#allocation8 + $0x20] sm:$0xff]
    %v111 = vld [vmem:[#allocation8 + $0x28] sm:$0xff]
    %v112 = vld [vmem:[#allocation8 + $0x30] sm:$0xff]
    %v113 = vld [vmem:[#allocation8 + $0x38] sm:$0xff]
    %v114 = vld [vmem:[#allocation8 + $0x40] sm:$0xff]
    %v115 = vld [vmem:[#allocation8 + $0x48] sm:$0xff]
    %v116 = vld [vmem:[#allocation8 + $0x50] sm:$0xff]
    %v117 = vld [vmem:[#allocation8 + $0x58] sm:$0xff]
    %v118 = vld [vmem:[#allocation8 + $0x60] sm:$0xff]
    %v119 = vld [vmem:[#allocation8 + $0x68] sm:$0xff]
    %v120 = vld [vmem:[#allocation8 + $0x70] sm:$0xff]
    %v121 = vld [vmem:[#allocation8 + $0x78] sm:$0xff]
    %v122 = vld [vmem:[#allocation8 + $0x80] sm:$0xff]
    %v123 = vld [vmem:[#allocation8 + $0x88] sm:$0xff]
    %v124 = vld [vmem:[#allocation8 + $0x90] sm:$0xff]
    %v125 = vld [vmem:[#allocation8 + $0x98] sm:$0xff]
    %vm126 = vcmask 261120
    %v128 = vsel %vm126, %v103, 0
    %130 = vmatprep.subr.mxu0 %v107
    %131 = vmatpush1.msra.mxu0 %v106
    %132 = vmatprep.subr.mxu0 %v112
    %133 = vmatpush1.msra.mxu0 %v111
    %134 = vmatprep.subr.mxu0 %v117
    %135 = vmatpush1.msra.mxu0 %v116
    %136 = vmatprep.subr.mxu0 %v122
    %137 = vmatpush1.msra.mxu0 %v121
    %138 = vmatprep.subr.mxu0 0.0
    %139 = vmatpush1.msra.mxu0 0.0
    %140 = vmatprep.subr.mxu0 0.0
    %141 = vmatpush1.msra.mxu0 0.0
    %142 = vmatprep.subr.mxu0 0.0
    %143 = vmatpush1.msra.mxu0 0.0
    %144 = vmatprep.subr.mxu0 0.0
    %145 = vmatpush1.msra.mxu0 0.0
    %146 = vmatprep.subr.mxu0 0.0
    %147 = vmatpush1.msra.mxu0 0.0
    %148 = vmatprep.subr.mxu0 0.0
    %149 = vmatpush1.msra.mxu0 0.0
    %150 = vmatprep.subr.mxu0 0.0
    %151 = vmatpush1.msra.mxu0 0.0
    %152 = vmatprep.subr.mxu0 0.0
    %153 = vmatpush1.msra.mxu0 0.0
    %154 = vmatprep.subr.mxu0 0.0
    %155 = vmatpush1.msra.mxu0 0.0
    %156 = vmatprep.subr.mxu0 0.0
    %157 = vmatpush1.msra.mxu0 0.0
    %158 = vmatprep.subr.mxu0 0.0
    %159 = vmatpush1.msra.mxu0 0.0
    %160 = vmatprep.subr.mxu0 0.0
    %161 = vmatpush1.msra.mxu0 0.0
    %162 = vmatprep.subr.mxu0 0.0
    %163 = vmatpush1.msra.mxu0 0.0
    %164 = vmatprep.subr.mxu0 0.0
    %165 = vmatpush1.msra.mxu0 0.0
    %166 = vmatprep.subr.mxu0 0.0
    %167 = vmatpush1.msra.mxu0 0.0
    %168 = vmatprep.subr.mxu0 0.0
    %169 = vmatpush1.msra.mxu0 0.0
    %170 = vmatprep.subr.mxu0 0.0
    %171 = vmatpush1.msra.mxu0 0.0
    %172 = vmatprep.subr.mxu0 0.0
    %173 = vmatpush1.msra.mxu0 0.0
    %174 = vmatprep.subr.mxu0 0.0
    %175 = vmatpush1.msra.mxu0 0.0
    %176 = vmatprep.subr.mxu0 0.0
    %177 = vmatpush1.msra.mxu0 0.0
    %178 = vmatprep.subr.mxu0 0.0
    %179 = vmatpush1.msra.mxu0 0.0
    %180 = vmatprep.subr.mxu0 0.0
    %181 = vmatpush1.msra.mxu0 0.0
    %182 = vmatprep.subr.mxu0 0.0
    %183 = vmatpush1.msra.mxu0 0.0
    %184 = vmatprep.subr.mxu0 0.0
    %185 = vmatpush1.msra.mxu0 0.0
    %186 = vmatprep.subr.mxu0 0.0
    %187 = vmatpush1.msra.mxu0 0.0
    %188 = vmatprep.subr.mxu0 0.0
    %189 = vmatpush1.msra.mxu0 0.0
    %190 = vmatprep.subr.mxu0 0.0
    %191 = vmatpush1.msra.mxu0 0.0
    %192 = vmatprep.subr.mxu0 0.0
    %193 = vmatpush1.msra.mxu0 0.0
    %194 = vmatprep.mubr.f32.mxu0 0.0
    %195 = vmatmul.mubr.f32.gmra.mrb[0].mxu0 %v128
    %v196 = vpop.f32.mrb[0].mxu0
    %v197 = vadd.f32 0.0, %v196
    %v198 = vpop.f32.mrb[0].mxu0
    %v199 = vadd.f32 0.0, %v198
    %200 = vdwg.mxu0
    %201 = vmatprep.subr.mxu0 %v109
    %202 = vmatpush1.msra.mxu0 %v108
    %203 = vmatprep.subr.mxu0 %v114
    %204 = vmatpush1.msra.mxu0 %v113
    %205 = vmatprep.subr.mxu0 %v119
    %206 = vmatpush1.msra.mxu0 %v118
    %207 = vmatprep.subr.mxu0 %v124
    %208 = vmatpush1.msra.mxu0 %v123
    %209 = vmatprep.subr.mxu0 0.0
    %210 = vmatpush1.msra.mxu0 0.0
    %211 = vmatprep.subr.mxu0 0.0
    %212 = vmatpush1.msra.mxu0 0.0
    %213 = vmatprep.subr.mxu0 0.0
    %214 = vmatpush1.msra.mxu0 0.0
    %215 = vmatprep.subr.mxu0 0.0
    %216 = vmatpush1.msra.mxu0 0.0
    %217 = vmatprep.subr.mxu0 0.0
    %218 = vmatpush1.msra.mxu0 0.0
    %219 = vmatprep.subr.mxu0 0.0
    %220 = vmatpush1.msra.mxu0 0.0
    %221 = vmatprep.subr.mxu0 0.0
    %222 = vmatpush1.msra.mxu0 0.0
    %223 = vmatprep.subr.mxu0 0.0
    %224 = vmatpush1.msra.mxu0 0.0
    %225 = vmatprep.subr.mxu0 0.0
    %226 = vmatpush1.msra.mxu0 0.0
    %227 = vmatprep.subr.mxu0 0.0
    %228 = vmatpush1.msra.mxu0 0.0
    %229 = vmatprep.subr.mxu0 0.0
    %230 = vmatpush1.msra.mxu0 0.0
    %231 = vmatprep.subr.mxu0 0.0
    %232 = vmatpush1.msra.mxu0 0.0
    %233 = vmatprep.subr.mxu0 0.0
    %234 = vmatpush1.msra.mxu0 0.0
    %235 = vmatprep.subr.mxu0 0.0
    %236 = vmatpush1.msra.mxu0 0.0
    %237 = vmatprep.subr.mxu0 0.0
    %238 = vmatpush1.msra.mxu0 0.0
    %239 = vmatprep.subr.mxu0 0.0
    %240 = vmatpush1.msra.mxu0 0.0
    %241 = vmatprep.subr.mxu0 0.0
    %242 = vmatpush1.msra.mxu0 0.0
    %243 = vmatprep.subr.mxu0 0.0
    %244 = vmatpush1.msra.mxu0 0.0
    %245 = vmatprep.subr.mxu0 0.0
    %246 = vmatpush1.msra.mxu0 0.0
    %247 = vmatprep.subr.mxu0 0.0
    %248 = vmatpush1.msra.mxu0 0.0
    %249 = vmatprep.subr.mxu0 0.0
    %250 = vmatpush1.msra.mxu0 0.0
    %251 = vmatprep.subr.mxu0 0.0
    %252 = vmatpush1.msra.mxu0 0.0
    %253 = vmatprep.subr.mxu0 0.0
    %254 = vmatpush1.msra.mxu0 0.0
    %255 = vmatprep.subr.mxu0 0.0
    %256 = vmatpush1.msra.mxu0 0.0
    %257 = vmatprep.subr.mxu0 0.0
    %258 = vmatpush1.msra.mxu0 0.0
    %259 = vmatprep.subr.mxu0 0.0
    %260 = vmatpush1.msra.mxu0 0.0
    %261 = vmatprep.subr.mxu0 0.0
    %262 = vmatpush1.msra.mxu0 0.0
    %263 = vmatprep.subr.mxu0 0.0
    %264 = vmatpush1.msra.mxu0 0.0
    %265 = vmatprep.mubr.f32.mxu0 0.0
    %266 = vmatmul.mubr.f32.gmra.mrb[0].mxu0 %v128
    %v267 = vpop.f32.mrb[0].mxu0
    %v268 = vadd.f32 0.0, %v267
    %v269 = vpop.f32.mrb[0].mxu0
    %v270 = vadd.f32 0.0, %v269
    %271 = vdwg.mxu0
    %272 = vmatprep.subr.mxu0 0.0
    %273 = vmatpush1.msra.mxu0 %v110
    %274 = vmatprep.subr.mxu0 0.0
    %275 = vmatpush1.msra.mxu0 %v115
    %276 = vmatprep.subr.mxu0 0.0
    %277 = vmatpush1.msra.mxu0 %v120
    %278 = vmatprep.subr.mxu0 0.0
    %279 = vmatpush1.msra.mxu0 %v125
    %280 = vmatprep.subr.mxu0 0.0
    %281 = vmatpush1.msra.mxu0 0.0
    %282 = vmatprep.subr.mxu0 0.0
    %283 = vmatpush1.msra.mxu0 0.0
    %284 = vmatprep.subr.mxu0 0.0
    %285 = vmatpush1.msra.mxu0 0.0
    %286 = vmatprep.subr.mxu0 0.0
    %287 = vmatpush1.msra.mxu0 0.0
    %288 = vmatprep.subr.mxu0 0.0
    %289 = vmatpush1.msra.mxu0 0.0
    %290 = vmatprep.subr.mxu0 0.0
    %291 = vmatpush1.msra.mxu0 0.0
    %292 = vmatprep.subr.mxu0 0.0
    %293 = vmatpush1.msra.mxu0 0.0
    %294 = vmatprep.subr.mxu0 0.0
    %295 = vmatpush1.msra.mxu0 0.0
    %296 = vmatprep.subr.mxu0 0.0
    %297 = vmatpush1.msra.mxu0 0.0
    %298 = vmatprep.subr.mxu0 0.0
    %299 = vmatpush1.msra.mxu0 0.0
    %300 = vmatprep.subr.mxu0 0.0
    %301 = vmatpush1.msra.mxu0 0.0
    %302 = vmatprep.subr.mxu0 0.0
    %303 = vmatpush1.msra.mxu0 0.0
    %304 = vmatprep.subr.mxu0 0.0
    %305 = vmatpush1.msra.mxu0 0.0
    %306 = vmatprep.subr.mxu0 0.0
    %307 = vmatpush1.msra.mxu0 0.0
    %308 = vmatprep.subr.mxu0 0.0
    %309 = vmatpush1.msra.mxu0 0.0
    %310 = vmatprep.subr.mxu0 0.0
    %311 = vmatpush1.msra.mxu0 0.0
    %312 = vmatprep.subr.mxu0 0.0
    %313 = vmatpush1.msra.mxu0 0.0
    %314 = vmatprep.subr.mxu0 0.0
    %315 = vmatpush1.msra.mxu0 0.0
    %316 = vmatprep.subr.mxu0 0.0
    %317 = vmatpush1.msra.mxu0 0.0
    %318 = vmatprep.subr.mxu0 0.0
    %319 = vmatpush1.msra.mxu0 0.0
    %320 = vmatprep.subr.mxu0 0.0
    %321 = vmatpush1.msra.mxu0 0.0
    %322 = vmatprep.subr.mxu0 0.0
    %323 = vmatpush1.msra.mxu0 0.0
    %324 = vmatprep.subr.mxu0 0.0
    %325 = vmatpush1.msra.mxu0 0.0
    %326 = vmatprep.subr.mxu0 0.0
    %327 = vmatpush1.msra.mxu0 0.0
    %328 = vmatprep.subr.mxu0 0.0
    %329 = vmatpush1.msra.mxu0 0.0
    %330 = vmatprep.subr.mxu0 0.0
    %331 = vmatpush1.msra.mxu0 0.0
    %332 = vmatprep.subr.mxu0 0.0
    %333 = vmatpush1.msra.mxu0 0.0
    %334 = vmatprep.subr.mxu0 0.0
    %335 = vmatpush1.msra.mxu0 0.0
    %336 = vmatprep.mubr.f32.mxu0 0.0
    %337 = vmatmul.mubr.f32.gmra.mrb[0].mxu0 %v128
    %v338 = vpop.f32.mrb[0].mxu0
    %v339 = vadd.f32 0.0, %v338
    %v340 = vpop.f32.mrb[0].mxu0
    %341 = vdwg.mxu0
    %v343 = vlaneseq
    %v344 = vshrl.u32 %v343, 7
    %v345 = vsub.s32 0, %v344
    %v346 = vrot.slane %v105, %v345
    %v347 = vlaneseq
    %v348 = vshrl.u32 %v347, 7
    %v349 = vsub.s32 1, %v348
    %v350 = vrot.slane %v105, %v349
    %v351 = vlaneseq
    %v352 = vshrl.u32 %v351, 7
    %v353 = vsub.s32 2, %v352
    %v354 = vrot.slane %v105, %v353
    %v355 = vlaneseq
    %v356 = vshrl.u32 %v355, 7
    %v357 = vsub.s32 3, %v356
    %v358 = vrot.slane %v105, %v357
    %v359 = vlaneseq
    %v360 = vshrl.u32 %v359, 7
    %v361 = vsub.s32 4, %v360
    %v362 = vrot.slane %v105, %v361
    %v368 = vadd.f32 %v346, %v197
    %v369 = vadd.f32 %v350, %v199
    %v370 = vadd.f32 %v354, %v268
    %v371 = vadd.f32 %v358, %v270
    %v372 = vadd.f32 %v362, %v339
    %v373 = vld [vmem:[#allocation10] sm:$0xff]
    %v374 = vld [vmem:[#allocation10 + $0x8] sm:$0xff]
    %v375 = vld [vmem:[#allocation10 + $0x10] sm:$0xff]
    %v376 = vld [vmem:[#allocation10 + $0x18] sm:$0xff]
    %v377 = vld [vmem:[#allocation10 + $0x20] sm:$0xff]
    %v378 = vld [vmem:[#allocation10 + $0x28] sm:$0xff]
    %v379 = vld [vmem:[#allocation10 + $0x30] sm:$0xff]
    %v380 = vld [vmem:[#allocation10 + $0x38] sm:$0xff]
    %v381 = vld [vmem:[#allocation10 + $0x40] sm:$0xff]
    %v382 = vld [vmem:[#allocation10 + $0x48] sm:$0xff]
    %v383 = vld [vmem:[#allocation10 + $0x50] sm:$0xff]
    %v384 = vld [vmem:[#allocation10 + $0x58] sm:$0xff]
    %v385 = vld [vmem:[#allocation10 + $0x60] sm:$0xff]
    %v386 = vld [vmem:[#allocation10 + $0x68] sm:$0xff]
    %v387 = vld [vmem:[#allocation10 + $0x70] sm:$0xff]
    %v388 = vld [vmem:[#allocation10 + $0x78] sm:$0xff]
    %v389 = vld [vmem:[#allocation10 + $0x80] sm:$0xff]
    %v390 = vld [vmem:[#allocation10 + $0x88] sm:$0xff]
    %v391 = vld [vmem:[#allocation10 + $0x90] sm:$0xff]
    %v392 = vld [vmem:[#allocation10 + $0x98] sm:$0xff]
    %v394 = vsel %vm126, %v104, 0
    %396 = vmatprep.subr.mxu0 %v374
    %397 = vmatpush1.msra.mxu0 %v373
    %398 = vmatprep.subr.mxu0 %v379
    %399 = vmatpush1.msra.mxu0 %v378
    %400 = vmatprep.subr.mxu0 %v384
    %401 = vmatpush1.msra.mxu0 %v383
    %402 = vmatprep.subr.mxu0 %v389
    %403 = vmatpush1.msra.mxu0 %v388
    %404 = vmatprep.subr.mxu0 0.0
    %405 = vmatpush1.msra.mxu0 0.0
    %406 = vmatprep.subr.mxu0 0.0
    %407 = vmatpush1.msra.mxu0 0.0
    %408 = vmatprep.subr.mxu0 0.0
    %409 = vmatpush1.msra.mxu0 0.0
    %410 = vmatprep.subr.mxu0 0.0
    %411 = vmatpush1.msra.mxu0 0.0
    %412 = vmatprep.subr.mxu0 0.0
    %413 = vmatpush1.msra.mxu0 0.0
    %414 = vmatprep.subr.mxu0 0.0
    %415 = vmatpush1.msra.mxu0 0.0
    %416 = vmatprep.subr.mxu0 0.0
    %417 = vmatpush1.msra.mxu0 0.0
    %418 = vmatprep.subr.mxu0 0.0
    %419 = vmatpush1.msra.mxu0 0.0
    %420 = vmatprep.subr.mxu0 0.0
    %421 = vmatpush1.msra.mxu0 0.0
    %422 = vmatprep.subr.mxu0 0.0
    %423 = vmatpush1.msra.mxu0 0.0
    %424 = vmatprep.subr.mxu0 0.0
    %425 = vmatpush1.msra.mxu0 0.0
    %426 = vmatprep.subr.mxu0 0.0
    %427 = vmatpush1.msra.mxu0 0.0
    %428 = vmatprep.subr.mxu0 0.0
    %429 = vmatpush1.msra.mxu0 0.0
    %430 = vmatprep.subr.mxu0 0.0
    %431 = vmatpush1.msra.mxu0 0.0
    %432 = vmatprep.subr.mxu0 0.0
    %433 = vmatpush1.msra.mxu0 0.0
    %434 = vmatprep.subr.mxu0 0.0
    %435 = vmatpush1.msra.mxu0 0.0
    %436 = vmatprep.subr.mxu0 0.0
    %437 = vmatpush1.msra.mxu0 0.0
    %438 = vmatprep.subr.mxu0 0.0
    %439 = vmatpush1.msra.mxu0 0.0
    %440 = vmatprep.subr.mxu0 0.0
    %441 = vmatpush1.msra.mxu0 0.0
    %442 = vmatprep.subr.mxu0 0.0
    %443 = vmatpush1.msra.mxu0 0.0
    %444 = vmatprep.subr.mxu0 0.0
    %445 = vmatpush1.msra.mxu0 0.0
    %446 = vmatprep.subr.mxu0 0.0
    %447 = vmatpush1.msra.mxu0 0.0
    %448 = vmatprep.subr.mxu0 0.0
    %449 = vmatpush1.msra.mxu0 0.0
    %450 = vmatprep.subr.mxu0 0.0
    %451 = vmatpush1.msra.mxu0 0.0
    %452 = vmatprep.subr.mxu0 0.0
    %453 = vmatpush1.msra.mxu0 0.0
    %454 = vmatprep.subr.mxu0 0.0
    %455 = vmatpush1.msra.mxu0 0.0
    %456 = vmatprep.subr.mxu0 0.0
    %457 = vmatpush1.msra.mxu0 0.0
    %458 = vmatprep.subr.mxu0 0.0
    %459 = vmatpush1.msra.mxu0 0.0
    %460 = vmatprep.mubr.f32.mxu0 0.0
    %461 = vmatmul.mubr.f32.gmra.mrb[0].mxu0 %v394
    %v462 = vpop.f32.mrb[0].mxu0
    %v463 = vadd.f32 0.0, %v462
    %v464 = vpop.f32.mrb[0].mxu0
    %v465 = vadd.f32 0.0, %v464
    %466 = vdwg.mxu0
    %467 = vmatprep.subr.mxu0 %v376
    %468 = vmatpush1.msra.mxu0 %v375
    %469 = vmatprep.subr.mxu0 %v381
    %470 = vmatpush1.msra.mxu0 %v380
    %471 = vmatprep.subr.mxu0 %v386
    %472 = vmatpush1.msra.mxu0 %v385
    %473 = vmatprep.subr.mxu0 %v391
    %474 = vmatpush1.msra.mxu0 %v390
    %475 = vmatprep.subr.mxu0 0.0
    %476 = vmatpush1.msra.mxu0 0.0
    %477 = vmatprep.subr.mxu0 0.0
    %478 = vmatpush1.msra.mxu0 0.0
    %479 = vmatprep.subr.mxu0 0.0
    %480 = vmatpush1.msra.mxu0 0.0
    %481 = vmatprep.subr.mxu0 0.0
    %482 = vmatpush1.msra.mxu0 0.0
    %483 = vmatprep.subr.mxu0 0.0
    %484 = vmatpush1.msra.mxu0 0.0
    %485 = vmatprep.subr.mxu0 0.0
    %486 = vmatpush1.msra.mxu0 0.0
    %487 = vmatprep.subr.mxu0 0.0
    %488 = vmatpush1.msra.mxu0 0.0
    %489 = vmatprep.subr.mxu0 0.0
    %490 = vmatpush1.msra.mxu0 0.0
    %491 = vmatprep.subr.mxu0 0.0
    %492 = vmatpush1.msra.mxu0 0.0
    %493 = vmatprep.subr.mxu0 0.0
    %494 = vmatpush1.msra.mxu0 0.0
    %495 = vmatprep.subr.mxu0 0.0
    %496 = vmatpush1.msra.mxu0 0.0
    %497 = vmatprep.subr.mxu0 0.0
    %498 = vmatpush1.msra.mxu0 0.0
    %499 = vmatprep.subr.mxu0 0.0
    %500 = vmatpush1.msra.mxu0 0.0
    %501 = vmatprep.subr.mxu0 0.0
    %502 = vmatpush1.msra.mxu0 0.0
    %503 = vmatprep.subr.mxu0 0.0
    %504 = vmatpush1.msra.mxu0 0.0
    %505 = vmatprep.subr.mxu0 0.0
    %506 = vmatpush1.msra.mxu0 0.0
    %507 = vmatprep.subr.mxu0 0.0
    %508 = vmatpush1.msra.mxu0 0.0
    %509 = vmatprep.subr.mxu0 0.0
    %510 = vmatpush1.msra.mxu0 0.0
    %511 = vmatprep.subr.mxu0 0.0
    %512 = vmatpush1.msra.mxu0 0.0
    %513 = vmatprep.subr.mxu0 0.0
    %514 = vmatpush1.msra.mxu0 0.0
    %515 = vmatprep.subr.mxu0 0.0
    %516 = vmatpush1.msra.mxu0 0.0
    %517 = vmatprep.subr.mxu0 0.0
    %518 = vmatpush1.msra.mxu0 0.0
    %519 = vmatprep.subr.mxu0 0.0
    %520 = vmatpush1.msra.mxu0 0.0
    %521 = vmatprep.subr.mxu0 0.0
    %522 = vmatpush1.msra.mxu0 0.0
    %523 = vmatprep.subr.mxu0 0.0
    %524 = vmatpush1.msra.mxu0 0.0
    %525 = vmatprep.subr.mxu0 0.0
    %526 = vmatpush1.msra.mxu0 0.0
    %527 = vmatprep.subr.mxu0 0.0
    %528 = vmatpush1.msra.mxu0 0.0
    %529 = vmatprep.subr.mxu0 0.0
    %530 = vmatpush1.msra.mxu0 0.0
    %531 = vmatprep.mubr.f32.mxu0 0.0
    %532 = vmatmul.mubr.f32.gmra.mrb[0].mxu0 %v394
    %v533 = vpop.f32.mrb[0].mxu0
    %v534 = vadd.f32 0.0, %v533
    %v535 = vpop.f32.mrb[0].mxu0
    %v536 = vadd.f32 0.0, %v535
    %537 = vdwg.mxu0
    %538 = vmatprep.subr.mxu0 0.0
    %539 = vmatpush1.msra.mxu0 %v377
    %540 = vmatprep.subr.mxu0 0.0
    %541 = vmatpush1.msra.mxu0 %v382
    %542 = vmatprep.subr.mxu0 0.0
    %543 = vmatpush1.msra.mxu0 %v387
    %544 = vmatprep.subr.mxu0 0.0
    %545 = vmatpush1.msra.mxu0 %v392
    %546 = vmatprep.subr.mxu0 0.0
    %547 = vmatpush1.msra.mxu0 0.0
    %548 = vmatprep.subr.mxu0 0.0
    %549 = vmatpush1.msra.mxu0 0.0
    %550 = vmatprep.subr.mxu0 0.0
    %551 = vmatpush1.msra.mxu0 0.0
    %552 = vmatprep.subr.mxu0 0.0
    %553 = vmatpush1.msra.mxu0 0.0
    %554 = vmatprep.subr.mxu0 0.0
    %555 = vmatpush1.msra.mxu0 0.0
    %556 = vmatprep.subr.mxu0 0.0
    %557 = vmatpush1.msra.mxu0 0.0
    %558 = vmatprep.subr.mxu0 0.0
    %559 = vmatpush1.msra.mxu0 0.0
    %560 = vmatprep.subr.mxu0 0.0
    %561 = vmatpush1.msra.mxu0 0.0
    %562 = vmatprep.subr.mxu0 0.0
    %563 = vmatpush1.msra.mxu0 0.0
    %564 = vmatprep.subr.mxu0 0.0
    %565 = vmatpush1.msra.mxu0 0.0
    %566 = vmatprep.subr.mxu0 0.0
    %567 = vmatpush1.msra.mxu0 0.0
    %568 = vmatprep.subr.mxu0 0.0
    %569 = vmatpush1.msra.mxu0 0.0
    %570 = vmatprep.subr.mxu0 0.0
    %571 = vmatpush1.msra.mxu0 0.0
    %572 = vmatprep.subr.mxu0 0.0
    %573 = vmatpush1.msra.mxu0 0.0
    %574 = vmatprep.subr.mxu0 0.0
    %575 = vmatpush1.msra.mxu0 0.0
    %576 = vmatprep.subr.mxu0 0.0
    %577 = vmatpush1.msra.mxu0 0.0
    %578 = vmatprep.subr.mxu0 0.0
    %579 = vmatpush1.msra.mxu0 0.0
    %580 = vmatprep.subr.mxu0 0.0
    %581 = vmatpush1.msra.mxu0 0.0
    %582 = vmatprep.subr.mxu0 0.0
    %583 = vmatpush1.msra.mxu0 0.0
    %584 = vmatprep.subr.mxu0 0.0
    %585 = vmatpush1.msra.mxu0 0.0
    %586 = vmatprep.subr.mxu0 0.0
    %587 = vmatpush1.msra.mxu0 0.0
    %588 = vmatprep.subr.mxu0 0.0
    %589 = vmatpush1.msra.mxu0 0.0
    %590 = vmatprep.subr.mxu0 0.0
    %591 = vmatpush1.msra.mxu0 0.0
    %592 = vmatprep.subr.mxu0 0.0
    %593 = vmatpush1.msra.mxu0 0.0
    %594 = vmatprep.subr.mxu0 0.0
    %595 = vmatpush1.msra.mxu0 0.0
    %596 = vmatprep.subr.mxu0 0.0
    %597 = vmatpush1.msra.mxu0 0.0
    %598 = vmatprep.subr.mxu0 0.0
    %599 = vmatpush1.msra.mxu0 0.0
    %600 = vmatprep.subr.mxu0 0.0
    %601 = vmatpush1.msra.mxu0 0.0
    %602 = vmatprep.mubr.f32.mxu0 0.0
    %603 = vmatmul.mubr.f32.gmra.mrb[0].mxu0 %v394
    %v604 = vpop.f32.mrb[0].mxu0
    %v605 = vadd.f32 0.0, %v604
    %v606 = vpop.f32.mrb[0].mxu0
    %607 = vdwg.mxu0
    %v608 = vadd.f32 %v368, %v463
    %v609 = vadd.f32 %v369, %v465
    %v610 = vadd.f32 %v370, %v534
    %v611 = vadd.f32 %v371, %v536
    %v612 = vadd.f32 %v372, %v605
    %v613 = vld [vmem:[#allocation7] sm:$0xff]
    %v614 = vld [vmem:[#allocation11] sm:$0xff]
    %v615 = vld [vmem:[#allocation11 + $0x8] sm:$0xff]
    %v616 = vld [vmem:[#allocation11 + $0x10] sm:$0xff]
    %v617 = vld [vmem:[#allocation11 + $0x18] sm:$0xff]
    %v618 = vld [vmem:[#allocation11 + $0x20] sm:$0xff]
    %v619 = vld [vmem:[#allocation11 + $0x28] sm:$0xff]
    %v620 = vld [vmem:[#allocation11 + $0x30] sm:$0xff]
    %v621 = vld [vmem:[#allocation11 + $0x38] sm:$0xff]
    %v622 = vld [vmem:[#allocation11 + $0x40] sm:$0xff]
    %v623 = vld [vmem:[#allocation11 + $0x48] sm:$0xff]
    %vm624 = vcmask 130048
    %v626 = vsel %vm624, %v613, 0
    %628 = vmatprep.subr.mxu0 %v615
    %629 = vmatpush1.msra.mxu0 %v614
    %630 = vmatprep.subr.mxu0 %v620
    %631 = vmatpush1.msra.mxu0 %v619
    %632 = vmatprep.subr.mxu0 0.0
    %633 = vmatpush1.msra.mxu0 0.0
    %634 = vmatprep.subr.mxu0 0.0
    %635 = vmatpush1.msra.mxu0 0.0
    %636 = vmatprep.subr.mxu0 0.0
    %637 = vmatpush1.msra.mxu0 0.0
    %638 = vmatprep.subr.mxu0 0.0
    %639 = vmatpush1.msra.mxu0 0.0
    %640 = vmatprep.subr.mxu0 0.0
    %641 = vmatpush1.msra.mxu0 0.0
    %642 = vmatprep.subr.mxu0 0.0
    %643 = vmatpush1.msra.mxu0 0.0
    %644 = vmatprep.subr.mxu0 0.0
    %645 = vmatpush1.msra.mxu0 0.0
    %646 = vmatprep.subr.mxu0 0.0
    %647 = vmatpush1.msra.mxu0 0.0
    %648 = vmatprep.subr.mxu0 0.0
    %649 = vmatpush1.msra.mxu0 0.0
    %650 = vmatprep.subr.mxu0 0.0
    %651 = vmatpush1.msra.mxu0 0.0
    %652 = vmatprep.subr.mxu0 0.0
    %653 = vmatpush1.msra.mxu0 0.0
    %654 = vmatprep.subr.mxu0 0.0
    %655 = vmatpush1.msra.mxu0 0.0
    %656 = vmatprep.subr.mxu0 0.0
    %657 = vmatpush1.msra.mxu0 0.0
    %658 = vmatprep.subr.mxu0 0.0
    %659 = vmatpush1.msra.mxu0 0.0
    %660 = vmatprep.subr.mxu0 0.0
    %661 = vmatpush1.msra.mxu0 0.0
    %662 = vmatprep.subr.mxu0 0.0
    %663 = vmatpush1.msra.mxu0 0.0
    %664 = vmatprep.subr.mxu0 0.0
    %665 = vmatpush1.msra.mxu0 0.0
    %666 = vmatprep.subr.mxu0 0.0
    %667 = vmatpush1.msra.mxu0 0.0
    %668 = vmatprep.subr.mxu0 0.0
    %669 = vmatpush1.msra.mxu0 0.0
    %670 = vmatprep.subr.mxu0 0.0
    %671 = vmatpush1.msra.mxu0 0.0
    %672 = vmatprep.subr.mxu0 0.0
    %673 = vmatpush1.msra.mxu0 0.0
    %674 = vmatprep.subr.mxu0 0.0
    %675 = vmatpush1.msra.mxu0 0.0
    %676 = vmatprep.subr.mxu0 0.0
    %677 = vmatpush1.msra.mxu0 0.0
    %678 = vmatprep.subr.mxu0 0.0
    %679 = vmatpush1.msra.mxu0 0.0
    %680 = vmatprep.subr.mxu0 0.0
    %681 = vmatpush1.msra.mxu0 0.0
    %682 = vmatprep.subr.mxu0 0.0
    %683 = vmatpush1.msra.mxu0 0.0
    %684 = vmatprep.subr.mxu0 0.0
    %685 = vmatpush1.msra.mxu0 0.0
    %686 = vmatprep.subr.mxu0 0.0
    %687 = vmatpush1.msra.mxu0 0.0
    %688 = vmatprep.subr.mxu0 0.0
    %689 = vmatpush1.msra.mxu0 0.0
    %690 = vmatprep.subr.mxu0 0.0
    %691 = vmatpush1.msra.mxu0 0.0
    %692 = vmatprep.mubr.f32.mxu0 0.0
    %693 = vmatmul.mubr.f32.gmra.mrb[0].mxu0 %v626
    %v694 = vpop.f32.mrb[0].mxu0
    %v695 = vadd.f32 0.0, %v694
    %v696 = vpop.f32.mrb[0].mxu0
    %v697 = vadd.f32 0.0, %v696
    %698 = vdwg.mxu0
    %699 = vmatprep.subr.mxu0 %v617
    %700 = vmatpush1.msra.mxu0 %v616
    %701 = vmatprep.subr.mxu0 %v622
    %702 = vmatpush1.msra.mxu0 %v621
    %703 = vmatprep.subr.mxu0 0.0
    %704 = vmatpush1.msra.mxu0 0.0
    %705 = vmatprep.subr.mxu0 0.0
    %706 = vmatpush1.msra.mxu0 0.0
    %707 = vmatprep.subr.mxu0 0.0
    %708 = vmatpush1.msra.mxu0 0.0
    %709 = vmatprep.subr.mxu0 0.0
    %710 = vmatpush1.msra.mxu0 0.0
    %711 = vmatprep.subr.mxu0 0.0
    %712 = vmatpush1.msra.mxu0 0.0
    %713 = vmatprep.subr.mxu0 0.0
    %714 = vmatpush1.msra.mxu0 0.0
    %715 = vmatprep.subr.mxu0 0.0
    %716 = vmatpush1.msra.mxu0 0.0
    %717 = vmatprep.subr.mxu0 0.0
    %718 = vmatpush1.msra.mxu0 0.0
    %719 = vmatprep.subr.mxu0 0.0
    %720 = vmatpush1.msra.mxu0 0.0
    %721 = vmatprep.subr.mxu0 0.0
    %722 = vmatpush1.msra.mxu0 0.0
    %723 = vmatprep.subr.mxu0 0.0
    %724 = vmatpush1.msra.mxu0 0.0
    %725 = vmatprep.subr.mxu0 0.0
    %726 = vmatpush1.msra.mxu0 0.0
    %727 = vmatprep.subr.mxu0 0.0
    %728 = vmatpush1.msra.mxu0 0.0
    %729 = vmatprep.subr.mxu0 0.0
    %730 = vmatpush1.msra.mxu0 0.0
    %731 = vmatprep.subr.mxu0 0.0
    %732 = vmatpush1.msra.mxu0 0.0
    %733 = vmatprep.subr.mxu0 0.0
    %734 = vmatpush1.msra.mxu0 0.0
    %735 = vmatprep.subr.mxu0 0.0
    %736 = vmatpush1.msra.mxu0 0.0
    %737 = vmatprep.subr.mxu0 0.0
    %738 = vmatpush1.msra.mxu0 0.0
    %739 = vmatprep.subr.mxu0 0.0
    %740 = vmatpush1.msra.mxu0 0.0
    %741 = vmatprep.subr.mxu0 0.0
    %742 = vmatpush1.msra.mxu0 0.0
    %743 = vmatprep.subr.mxu0 0.0
    %744 = vmatpush1.msra.mxu0 0.0
    %745 = vmatprep.subr.mxu0 0.0
    %746 = vmatpush1.msra.mxu0 0.0
    %747 = vmatprep.subr.mxu0 0.0
    %748 = vmatpush1.msra.mxu0 0.0
    %749 = vmatprep.subr.mxu0 0.0
    %750 = vmatpush1.msra.mxu0 0.0
    %751 = vmatprep.subr.mxu0 0.0
    %752 = vmatpush1.msra.mxu0 0.0
    %753 = vmatprep.subr.mxu0 0.0
    %754 = vmatpush1.msra.mxu0 0.0
    %755 = vmatprep.subr.mxu0 0.0
    %756 = vmatpush1.msra.mxu0 0.0
    %757 = vmatprep.subr.mxu0 0.0
    %758 = vmatpush1.msra.mxu0 0.0
    %759 = vmatprep.subr.mxu0 0.0
    %760 = vmatpush1.msra.mxu0 0.0
    %761 = vmatprep.subr.mxu0 0.0
    %762 = vmatpush1.msra.mxu0 0.0
    %763 = vmatprep.mubr.f32.mxu0 0.0
    %764 = vmatmul.mubr.f32.gmra.mrb[0].mxu0 %v626
    %v765 = vpop.f32.mrb[0].mxu0
    %v766 = vadd.f32 0.0, %v765
    %v767 = vpop.f32.mrb[0].mxu0
    %v768 = vadd.f32 0.0, %v767
    %769 = vdwg.mxu0
    %770 = vmatprep.subr.mxu0 0.0
    %771 = vmatpush1.msra.mxu0 %v618
    %772 = vmatprep.subr.mxu0 0.0
    %773 = vmatpush1.msra.mxu0 %v623
    %774 = vmatprep.subr.mxu0 0.0
    %775 = vmatpush1.msra.mxu0 0.0
    %776 = vmatprep.subr.mxu0 0.0
    %777 = vmatpush1.msra.mxu0 0.0
    %778 = vmatprep.subr.mxu0 0.0
    %779 = vmatpush1.msra.mxu0 0.0
    %780 = vmatprep.subr.mxu0 0.0
    %781 = vmatpush1.msra.mxu0 0.0
    %782 = vmatprep.subr.mxu0 0.0
    %783 = vmatpush1.msra.mxu0 0.0
    %784 = vmatprep.subr.mxu0 0.0
    %785 = vmatpush1.msra.mxu0 0.0
    %786 = vmatprep.subr.mxu0 0.0
    %787 = vmatpush1.msra.mxu0 0.0
    %788 = vmatprep.subr.mxu0 0.0
    %789 = vmatpush1.msra.mxu0 0.0
    %790 = vmatprep.subr.mxu0 0.0
    %791 = vmatpush1.msra.mxu0 0.0
    %792 = vmatprep.subr.mxu0 0.0
    %793 = vmatpush1.msra.mxu0 0.0
    %794 = vmatprep.subr.mxu0 0.0
    %795 = vmatpush1.msra.mxu0 0.0
    %796 = vmatprep.subr.mxu0 0.0
    %797 = vmatpush1.msra.mxu0 0.0
    %798 = vmatprep.subr.mxu0 0.0
    %799 = vmatpush1.msra.mxu0 0.0
    %800 = vmatprep.subr.mxu0 0.0
    %801 = vmatpush1.msra.mxu0 0.0
    %802 = vmatprep.subr.mxu0 0.0
    %803 = vmatpush1.msra.mxu0 0.0
    %804 = vmatprep.subr.mxu0 0.0
    %805 = vmatpush1.msra.mxu0 0.0
    %806 = vmatprep.subr.mxu0 0.0
    %807 = vmatpush1.msra.mxu0 0.0
    %808 = vmatprep.subr.mxu0 0.0
    %809 = vmatpush1.msra.mxu0 0.0
    %810 = vmatprep.subr.mxu0 0.0
    %811 = vmatpush1.msra.mxu0 0.0
    %812 = vmatprep.subr.mxu0 0.0
    %813 = vmatpush1.msra.mxu0 0.0
    %814 = vmatprep.subr.mxu0 0.0
    %815 = vmatpush1.msra.mxu0 0.0
    %816 = vmatprep.subr.mxu0 0.0
    %817 = vmatpush1.msra.mxu0 0.0
    %818 = vmatprep.subr.mxu0 0.0
    %819 = vmatpush1.msra.mxu0 0.0
    %820 = vmatprep.subr.mxu0 0.0
    %821 = vmatpush1.msra.mxu0 0.0
    %822 = vmatprep.subr.mxu0 0.0
    %823 = vmatpush1.msra.mxu0 0.0
    %824 = vmatprep.subr.mxu0 0.0
    %825 = vmatpush1.msra.mxu0 0.0
    %826 = vmatprep.subr.mxu0 0.0
    %827 = vmatpush1.msra.mxu0 0.0
    %828 = vmatprep.subr.mxu0 0.0
    %829 = vmatpush1.msra.mxu0 0.0
    %830 = vmatprep.subr.mxu0 0.0
    %831 = vmatpush1.msra.mxu0 0.0
    %832 = vmatprep.subr.mxu0 0.0
    %833 = vmatpush1.msra.mxu0 0.0
    %834 = vmatprep.mubr.f32.mxu0 0.0
    %835 = vmatmul.mubr.f32.gmra.mrb[0].mxu0 %v626
    %v836 = vpop.f32.mrb[0].mxu0
    %v837 = vadd.f32 0.0, %v836
    %v838 = vpop.f32.mrb[0].mxu0
    %839 = vdwg.mxu0
    %v840 = vadd.f32 %v608, %v695
    %v841 = vadd.f32 %v609, %v697
    %v842 = vadd.f32 %v610, %v766
    %v843 = vadd.f32 %v611, %v768
    %v844 = vadd.f32 %v612, %v837
    %v845 = vtanh.pop %v840
    %v846 = vmul.f32 %v841, 0.5
    %v847 = vtanh.pop %v846
    %v848 = vadd.f32 %v847, 1.0
    %v849 = vmul.f32 %v848, 0.5
    %v850 = vmul.f32 %v845, %v849
    %v851 = vmul.f32 %v842, 0.5
    %v852 = vtanh.pop %v851
    %v853 = vadd.f32 %v852, 1.0
    %v854 = vmul.f32 %v853, 0.5
    %855 = vrot.lane.b32.xlu0 %v103, 96
    %v856 = vpop.permute.xlu0 %855
    %v858 = vmul.f32 %v854, %v856
    %v859 = vadd.f32 %v850, %v858
    %v860 = vmul.f32 %v843, 0.5
    %v861 = vtanh.pop %v860
    %v862 = vadd.f32 %v861, 1.0
    %v863 = vmul.f32 %v862, 0.5
    %864 = vrot.lane.b32.xlu0 %v104, 96
    %v865 = vpop.permute.xlu0 %864
    %v867 = vmul.f32 %v863, %v865
    %v868 = vadd.f32 %v859, %v867
    %v869 = vmul.f32 %v844, 0.5
    %v870 = vtanh.pop %v869
    %v871 = vadd.f32 %v870, 1.0
    %v872 = vmul.f32 %v871, 0.5
    %v873 = vtanh.pop %v868
    %v874 = vmul.f32 %v872, %v873
    %875 = vst.msk [vmem:[#allocation13] sm:$0xff] %vm126, %v874
    %877 = vrot.lane.b32.xlu0 %v868, 32
    %v878 = vpop.permute.xlu0 %877
    %vm880 = vcmask 523520
    %881 = vst.msk [vmem:[#allocation13] sm:$0xff] %vm880, %v878
    // Predicated region
    $region54: #{_forward_tracked.1} parent=1 // pred_check
      _
    $region55: #{_forward_tracked.1} parent=1 // pred_check_branch
      %883 = sbr.rel (0) target = $region57
    $region56: #{_forward_tracked.1} parent=1 // pred_region
      %s885 = ssub.s32 128, 128
      %886 = vsyncadd [#allocation4], %s885
      %s888 = sshll.u32 [#allocation13], 4
      %s889 = int_to_ptr.vmem [resolvable:$true] %s888
      %891 = dma.vmem_to_hbm [thread:$0]  %s889, 128, %s7, [#allocation4]
    $region57: #{_forward_tracked.1} parent=1 // pred_fallthru
      _
    // Predicated region
    $region58: #{_forward_tracked.1} parent=1 // pred_check
      _
    $region59: #{_forward_tracked.1} parent=1 // pred_check_branch
      %893 = sbr.rel (0) target = $region61
    $region60: #{_forward_tracked.1} parent=1 // pred_region
      %894 = dma.done [#allocation4], 128
    $region61: #{_forward_tracked.1} parent=1 // pred_fallthru
      _
    %895 = vsyncpa [#allocation3], 1
    %896 = vsyncpa [#allocation6], 1
    %897 = vsyncpa [#allocation9], 1
    %898 = vsyncpa [#allocation12], 1
    %899 = vsyncpa [#allocation4], 1

</llo_original>
